<compile_context>
chip_gen: v6e
topology: v6e:2x2x1
jax: 0.10.0
libtpu: 0.0.40
codegen_flags: <defaults>
</compile_context>

<pallas_src>
import jax
import jax.numpy as jnp
from jax.experimental import pallas as pl
from jax.experimental.pallas import tpu as pltpu

MAX_TILE_B = 1024    # batch rows per grid step; safe on v5e/v6e/v7x scoped VMEM
MIN_SPLIT_B = 256    # batches at least this big are split into >=2 grid steps


def _cdiv(a, b):
    return (a + b - 1) // b


def _round_up(n, m):
    return _cdiv(n, m) * m


def _batch_tiling(B):
    """Pick (tile_b, padded_batch, n_steps).

    tile_b is a multiple of 16 (bf16 sublane tile); padding is at most
    16*n_steps - 1 rows beyond B (never a full extra tile)."""
    n_steps = _cdiv(B, MAX_TILE_B)
    if n_steps == 1 and B >= MIN_SPLIT_B:
        n_steps = 2          # keep both v7x TensorCores busy when batch allows
    tile_b = _round_up(_cdiv(B, n_steps), 16)
    return tile_b, n_steps * tile_b, n_steps


def dqn_kernel(x_ref, w1_ref, b1_ref, w2_ref, b2_ref, w3_ref, b3_ref, out_ref):
    # x arrives at true width (tile_b, state_size) in f32; cast to bf16 for the
    # MXU.  All accumulation is f32; bias adds / ReLU stay f32 (v5e VPU has no
    # bf16 path).
    x = x_ref[...].astype(jnp.bfloat16)
    # layer 1: Linear + ReLU
    h = jnp.dot(x, w1_ref[...], preferred_element_type=jnp.float32)
    h = jnp.maximum(h + b1_ref[...], 0.0)
    # layer 2: Linear + ReLU
    h = jnp.dot(h.astype(jnp.bfloat16), w2_ref[...],
                preferred_element_type=jnp.float32)
    h = jnp.maximum(h + b2_ref[...], 0.0)
    # layer 3: Linear (no activation), true action_size width (masked vst)
    o = jnp.dot(h.astype(jnp.bfloat16), w3_ref[...],
                preferred_element_type=jnp.float32)
    out_ref[...] = (o + b3_ref[...]).astype(out_ref.dtype)


def prepare_params(params):
    """One-time parameter prep (hoisted out of the per-step forward):
    weights -> bf16 (MXU input dtype), biases -> f32 row vectors."""
    return {
        "w1": params["w1"].astype(jnp.bfloat16),
        "w2": params["w2"].astype(jnp.bfloat16),
        "w3": params["w3"].astype(jnp.bfloat16),
        "b1": params["b1"].reshape(1, -1).astype(jnp.float32),
        "b2": params["b2"].reshape(1, -1).astype(jnp.float32),
        "b3": params["b3"].reshape(1, -1).astype(jnp.float32),
    }


@jax.jit
def dqn_forward(x, p):
    """x: (B, state_size) float32; p: output of prepare_params().

    Weights are (in_dim, out_dim) (transposed from nn.Linear), biases (1, out).
    Returns (B, action_size) float32 Q-values.
    """
    B, state_size = x.shape
    h1 = p["w1"].shape[1]
    h2 = p["w2"].shape[1]
    action_size = p["w3"].shape[1]

    tile_b, bp, n_steps = _batch_tiling(B)
    # Row-only padding (feature dims keep their true widths).
    xp = x if bp == B else jnp.pad(x, ((0, bp - B), (0, 0)))

    resident = lambda shape: pl.BlockSpec(shape, lambda i: (0, 0))

    out = pl.pallas_call(
        dqn_kernel,
        out_shape=jax.ShapeDtypeStruct((bp, action_size), jnp.float32),
        grid_spec=pl.GridSpec(
            grid=(n_steps,),
            in_specs=[
                pl.BlockSpec((tile_b, state_size), lambda i: (i, 0)),  # x streamed
                resident((state_size, h1)),                            # w1
                resident((1, h1)),                                     # b1
                resident((h1, h2)),                                    # w2
                resident((1, h2)),                                     # b2
                resident((h2, action_size)),                           # w3
                resident((1, action_size)),                            # b3
            ],
            out_specs=pl.BlockSpec((tile_b, action_size), lambda i: (i, 0)),
        ),
        compiler_params=pltpu.CompilerParams(
            dimension_semantics=("parallel",)),
    )(xp, p["w1"], p["b1"], p["w2"], p["b2"], p["w3"], p["b3"])

    return out if bp == B else out[:B]


def init_params(key, state_size, action_size, hidden_sizes=(128, 128)):
    """Deterministic init mimicking nn.Linear's U(-1/sqrt(fan_in), 1/sqrt(fan_in))."""
    dims = [state_size] + list(hidden_sizes) + [action_size]
    params = {}
    for i, (din, dout) in enumerate(zip(dims[:-1], dims[1:]), start=1):
        key, kw, kb = jax.random.split(key, 3)
        bound = 1.0 / jnp.sqrt(jnp.float32(din))
        params[f"w{i}"] = jax.random.uniform(
            kw, (din, dout), jnp.float32, -bound, bound)
        params[f"b{i}"] = jax.random.uniform(
            kb, (1, dout), jnp.float32, -bound, bound)
    return params


def dqn_reference(x, params):
    """Pure-JAX reference matching kernel numerics: bf16 matmul inputs, f32 acc."""
    bf = jnp.bfloat16
    h = jnp.dot(x.astype(bf), params["w1"].astype(bf),
                preferred_element_type=jnp.float32)
    h = jnp.maximum(h + params["b1"], 0.0)
    h = jnp.dot(h.astype(bf), params["w2"].astype(bf),
                preferred_element_type=jnp.float32)
    h = jnp.maximum(h + params["b2"], 0.0)
    o = jnp.dot(h.astype(bf), params["w3"].astype(bf),
                preferred_element_type=jnp.float32)
    return o + params["b3"]


if __name__ == "__main__":
    key = jax.random.PRNGKey(0)
    state_size, action_size, batch = 16, 8, 8

    kp, kx = jax.random.split(key)
    params = init_params(kp, state_size, action_size)
    x = jax.random.normal(kx, (batch, state_size), jnp.float32)

    prepped = prepare_params(params)          # one-time, outside the forward
    out = dqn_forward(x, prepped)
    out = jax.block_until_ready(out)

    ref = dqn_reference(x, params)
    assert out.shape == (batch, action_size)
    assert jnp.allclose(out, ref, atol=5e-3, rtol=5e-3), "mismatch vs reference"

    print("KERNEL_OK")
</pallas_src>

<mosaic_0001>
module attributes {stable_mosaic.version = 11 : i64} {
  func.func @dqn_kernel(%arg0: i32, %arg1: memref<16x16xf32, #tpu.memory_space<vmem>>, %arg2: memref<16x128xbf16, #tpu.memory_space<vmem>>, %arg3: memref<1x128xf32, #tpu.memory_space<vmem>>, %arg4: memref<128x128xbf16, #tpu.memory_space<vmem>>, %arg5: memref<1x128xf32, #tpu.memory_space<vmem>>, %arg6: memref<128x8xbf16, #tpu.memory_space<vmem>>, %arg7: memref<1x8xf32, #tpu.memory_space<vmem>>, %arg8: memref<16x8xf32, #tpu.memory_space<vmem>>) attributes {dimension_semantics = [#tpu.dimension_semantics<parallel>], iteration_bounds = array<i64: 1>, scalar_prefetch = 0 : i64, scratch_operands = 0 : i64, tpu.core_type = #tpu.core_type<tc>, window_params = [{transform_indices = @transform_0, window_bounds = array<i64: 16, 16>}, {pipeline_mode = #tpu.pipeline_mode<synchronous>, transform_indices = @transform_1, window_bounds = array<i64: 16, 128>}, {pipeline_mode = #tpu.pipeline_mode<synchronous>, transform_indices = @transform_2, window_bounds = array<i64: 1, 128>}, {pipeline_mode = #tpu.pipeline_mode<synchronous>, transform_indices = @transform_3, window_bounds = array<i64: 128, 128>}, {pipeline_mode = #tpu.pipeline_mode<synchronous>, transform_indices = @transform_4, window_bounds = array<i64: 1, 128>}, {pipeline_mode = #tpu.pipeline_mode<synchronous>, transform_indices = @transform_5, window_bounds = array<i64: 128, 8>}, {pipeline_mode = #tpu.pipeline_mode<synchronous>, transform_indices = @transform_6, window_bounds = array<i64: 1, 8>}, {transform_indices = @transform_7, window_bounds = array<i64: 16, 8>}]} {
    %c0 = arith.constant 0 : index
    %c0_0 = arith.constant 0 : index
    %0 = vector.load %arg1[%c0, %c0_0] : memref<16x16xf32, #tpu.memory_space<vmem>>, vector<16x16xf32>
    %1 = arith.truncf %0 : vector<16x16xf32> to vector<16x16xbf16>
    %c0_1 = arith.constant 0 : index
    %c0_2 = arith.constant 0 : index
    %2 = vector.load %arg2[%c0_1, %c0_2] : memref<16x128xbf16, #tpu.memory_space<vmem>>, vector<16x128xbf16>
    %cst = arith.constant dense<0.000000e+00> : vector<16x128xf32>
    %3 = tpu.matmul %1, %2, %cst {dimension_numbers = #tpu.dot_dimension_numbers<[1], [0], [0], [1], [0, 0, 1, 1], [], []>} : vector<16x16xbf16>, vector<16x128xbf16>, vector<16x128xf32> -> vector<16x128xf32>
    %c0_3 = arith.constant 0 : index
    %c0_4 = arith.constant 0 : index
    %4 = vector.load %arg3[%c0_3, %c0_4] : memref<1x128xf32, #tpu.memory_space<vmem>>, vector<1x128xf32>
    %5 = vector.broadcast %4 : vector<1x128xf32> to vector<16x128xf32>
    %6 = arith.addf %3, %5 : vector<16x128xf32>
    %cst_5 = arith.constant 0.000000e+00 : f32
    %7 = vector.broadcast %cst_5 : f32 to vector<16x128xf32>
    %8 = arith.maximumf %6, %7 : vector<16x128xf32>
    %9 = arith.truncf %8 : vector<16x128xf32> to vector<16x128xbf16>
    %c0_6 = arith.constant 0 : index
    %c0_7 = arith.constant 0 : index
    %10 = vector.load %arg4[%c0_6, %c0_7] : memref<128x128xbf16, #tpu.memory_space<vmem>>, vector<128x128xbf16>
    %cst_8 = arith.constant dense<0.000000e+00> : vector<16x128xf32>
    %11 = tpu.matmul %9, %10, %cst_8 {dimension_numbers = #tpu.dot_dimension_numbers<[1], [0], [0], [1], [0, 0, 1, 1], [], []>} : vector<16x128xbf16>, vector<128x128xbf16>, vector<16x128xf32> -> vector<16x128xf32>
    %c0_9 = arith.constant 0 : index
    %c0_10 = arith.constant 0 : index
    %12 = vector.load %arg5[%c0_9, %c0_10] : memref<1x128xf32, #tpu.memory_space<vmem>>, vector<1x128xf32>
    %13 = vector.broadcast %12 : vector<1x128xf32> to vector<16x128xf32>
    %14 = arith.addf %11, %13 : vector<16x128xf32>
    %cst_11 = arith.constant 0.000000e+00 : f32
    %15 = vector.broadcast %cst_11 : f32 to vector<16x128xf32>
    %16 = arith.maximumf %14, %15 : vector<16x128xf32>
    %17 = arith.truncf %16 : vector<16x128xf32> to vector<16x128xbf16>
    %c0_12 = arith.constant 0 : index
    %c0_13 = arith.constant 0 : index
    %18 = vector.load %arg6[%c0_12, %c0_13] : memref<128x8xbf16, #tpu.memory_space<vmem>>, vector<128x8xbf16>
    %cst_14 = arith.constant dense<0.000000e+00> : vector<16x8xf32>
    %19 = tpu.matmul %17, %18, %cst_14 {dimension_numbers = #tpu.dot_dimension_numbers<[1], [0], [0], [1], [0, 0, 1, 1], [], []>} : vector<16x128xbf16>, vector<128x8xbf16>, vector<16x8xf32> -> vector<16x8xf32>
    %c0_15 = arith.constant 0 : index
    %c0_16 = arith.constant 0 : index
    %20 = vector.load %arg7[%c0_15, %c0_16] : memref<1x8xf32, #tpu.memory_space<vmem>>, vector<1x8xf32>
    %21 = vector.broadcast %20 : vector<1x8xf32> to vector<16x8xf32>
    %22 = arith.addf %19, %21 : vector<16x8xf32>
    %c0_17 = arith.constant 0 : index
    %c0_18 = arith.constant 0 : index
    %23 = vector.load %arg8[%c0_17, %c0_18] : memref<16x8xf32, #tpu.memory_space<vmem>>, vector<16x8xf32>
    tpu.vector_store %arg8[%c0_17, %c0_18], %22 {strides = array<i32>} : memref<16x8xf32, #tpu.memory_space<vmem>>, vector<16x8xf32>,
    return
  }
  func.func @transform_0(%arg0: i32) -> (i32, i32) {
    %c0_i32 = arith.constant 0 : i32
    %c0_i32_0 = arith.constant 0 : i32
    return %arg0, %c0_i32 : i32, i32
  }
  func.func @transform_1(%arg0: i32) -> (i32, i32) {
    %c0_i32 = arith.constant 0 : i32
    %c0_i32_0 = arith.constant 0 : i32
    %c0_i32_1 = arith.constant 0 : i32
    return %c0_i32, %c0_i32_0 : i32, i32
  }
  func.func @transform_2(%arg0: i32) -> (i32, i32) {
    %c0_i32 = arith.constant 0 : i32
    %c0_i32_0 = arith.constant 0 : i32
    %c0_i32_1 = arith.constant 0 : i32
    return %c0_i32, %c0_i32_0 : i32, i32
  }
  func.func @transform_3(%arg0: i32) -> (i32, i32) {
    %c0_i32 = arith.constant 0 : i32
    %c0_i32_0 = arith.constant 0 : i32
    %c0_i32_1 = arith.constant 0 : i32
    return %c0_i32, %c0_i32_0 : i32, i32
  }
  func.func @transform_4(%arg0: i32) -> (i32, i32) {
    %c0_i32 = arith.constant 0 : i32
    %c0_i32_0 = arith.constant 0 : i32
    %c0_i32_1 = arith.constant 0 : i32
    return %c0_i32, %c0_i32_0 : i32, i32
  }
  func.func @transform_5(%arg0: i32) -> (i32, i32) {
    %c0_i32 = arith.constant 0 : i32
    %c0_i32_0 = arith.constant 0 : i32
    %c0_i32_1 = arith.constant 0 : i32
    return %c0_i32, %c0_i32_0 : i32, i32
  }
  func.func @transform_6(%arg0: i32) -> (i32, i32) {
    %c0_i32 = arith.constant 0 : i32
    %c0_i32_0 = arith.constant 0 : i32
    %c0_i32_1 = arith.constant 0 : i32
    return %c0_i32, %c0_i32_0 : i32, i32
  }
  func.func @transform_7(%arg0: i32) -> (i32, i32) {
    %c0_i32 = arith.constant 0 : i32
    %c0_i32_0 = arith.constant 0 : i32
    return %arg0, %c0_i32 : i32, i32
  }
}

</mosaic_0001>

<llo_original>
// kernel: dqn_forward.1
$region0: #{dqn_forward.1}
  #allocation0 [shape = 'u32[]', space=smem, size = 0x4, offset = 0x4, fixed_abs, tag = 'smem constant byte address 0x4 - core index']
  #allocation1 [shape = 'u32[144,128]{1,0:T(1,128)}', space=vmem, size = 0x12000, scoped, tag = 'internal scratch']
  %s0 = inlined_call_operand.vmem [shape: f32[16,16], index: 0, kind: input, shape index: {}]
  %s1 = inlined_call_operand.vmem [shape: bf16[16,128], index: 1, kind: input, shape index: {}]
  %s2 = inlined_call_operand.vmem [shape: f32[1,128], index: 2, kind: input, shape index: {}]
  %s3 = inlined_call_operand.vmem [shape: bf16[128,128], index: 3, kind: input, shape index: {}]
  %s4 = inlined_call_operand.vmem [shape: f32[1,128], index: 4, kind: input, shape index: {}]
  %s5 = inlined_call_operand.vmem [shape: bf16[128,8], index: 5, kind: input, shape index: {}]
  %s6 = inlined_call_operand.vmem [shape: f32[1,8], index: 6, kind: input, shape index: {}]
  %s7 = inlined_call_operand.vmem [shape: f32[16,8], index: 7, kind: output, shape index: {}]
  %s8 = sld [smem:[#allocation0]]
  $region38: #{dqn_forward.1} parent=0
    _
  %s10 = ssub.s32 1, %s8
  %s11 = scalar_select 0, %s10, %s8
  // Predicated region
  $region2: #{dqn_forward.1} parent=0 // pred_check
    _
  $region3: #{dqn_forward.1} parent=0 // pred_check_branch
    %13 = sbr.rel (0) target = $region5
  $region4: #{dqn_forward.1} parent=0 // pred_region
    _
  $region5: #{dqn_forward.1} parent=0 // pred_fallthru
    _
  // Predicated region
  $region6: #{dqn_forward.1} parent=0 // pred_check
    _
  $region7: #{dqn_forward.1} parent=0 // pred_check_branch
    %15 = sbr.rel (0) target = $region9
  $region8: #{dqn_forward.1} parent=0 // pred_region
    _
  $region9: #{dqn_forward.1} parent=0 // pred_fallthru
    _
  // Predicated region
  $region10: #{dqn_forward.1} parent=0 // pred_check
    _
  $region11: #{dqn_forward.1} parent=0 // pred_check_branch
    %17 = sbr.rel (0) target = $region13
  $region12: #{dqn_forward.1} parent=0 // pred_region
    _
  $region13: #{dqn_forward.1} parent=0 // pred_fallthru
    _
  // Predicated region
  $region14: #{dqn_forward.1} parent=0 // pred_check
    _
  $region15: #{dqn_forward.1} parent=0 // pred_check_branch
    %19 = sbr.rel (0) target = $region17
  $region16: #{dqn_forward.1} parent=0 // pred_region
    _
  $region17: #{dqn_forward.1} parent=0 // pred_fallthru
    _
  // Predicated region
  $region18: #{dqn_forward.1} parent=0 // pred_check
    _
  $region19: #{dqn_forward.1} parent=0 // pred_check_branch
    %21 = sbr.rel (0) target = $region21
  $region20: #{dqn_forward.1} parent=0 // pred_region
    _
  $region21: #{dqn_forward.1} parent=0 // pred_fallthru
    _
  // Predicated region
  $region22: #{dqn_forward.1} parent=0 // pred_check
    _
  $region23: #{dqn_forward.1} parent=0 // pred_check_branch
    %23 = sbr.rel (0) target = $region25
  $region24: #{dqn_forward.1} parent=0 // pred_region
    _
  $region25: #{dqn_forward.1} parent=0 // pred_fallthru
    _
  // Predicated region
  $region26: #{dqn_forward.1} parent=0 // pred_check
    _
  $region27: #{dqn_forward.1} parent=0 // pred_check_branch
    %25 = sbr.rel (0) target = $region29
  $region28: #{dqn_forward.1} parent=0 // pred_region
    _
  $region29: #{dqn_forward.1} parent=0 // pred_fallthru
    _
  %v27 = vld [vmem:[%s0] sm:$0xff]
  %v28 = vld [vmem:[%s0 + $0x8] sm:$0xff]
  %v29 = vpack.c.bf16 %v28, %v27
  %v30 = vld [vmem:[%s1] sm:$0xf]
  %v31 = vld [vmem:[%s1 + $0x4] sm:$0xf]
  %v32 = vld [vmem:[%s2] sm:$0x1]
  %v34 = vlaneseq
  %v35 = vshrl.u32 %v34, 7
  %v36 = vsub.s32 0, %v35
  %v37 = vrot.slane %v32, %v36
  %v41 = vunpack.c.l.b16 %v30
  %v42 = vunpack.c.l.b16 %v31
  %v43 = vpack.c.b16 %v42, %v41
  %vm45 = vcmask 130048
  %v47 = vsel %vm45, %v29, 0
  %49 = vmatprep.subr.bf16.mxu0 0
  %50 = vmatpush1.bf16.msra.mxu0 0
  %51 = vmatprep.subr.bf16.mxu0 0
  %52 = vmatpush1.bf16.msra.mxu0 0
  %53 = vmatprep.subr.bf16.mxu0 0
  %54 = vmatpush1.bf16.msra.mxu0 0
  %55 = vmatprep.subr.bf16.mxu0 0
  %56 = vmatpush1.bf16.msra.mxu0 0
  %57 = vmatprep.subr.bf16.mxu0 0
  %58 = vmatpush1.bf16.msra.mxu0 0
  %59 = vmatprep.subr.bf16.mxu0 0
  %60 = vmatpush1.bf16.msra.mxu0 0
  %61 = vmatprep.subr.bf16.mxu0 0
  %62 = vmatpush1.bf16.msra.mxu0 0
  %63 = vmatprep.subr.bf16.mxu0 0
  %64 = vmatpush1.bf16.msra.mxu0 %v43
  %65 = vmatprep.subr.bf16.mxu0 0
  %66 = vmatpush2.bf16.msra.mxu0 0
  %67 = vmatprep.subr.bf16.mxu0 0
  %68 = vmatpush2.bf16.msra.mxu0 0
  %69 = vmatprep.subr.bf16.mxu0 0
  %70 = vmatpush2.bf16.msra.mxu0 0
  %71 = vmatprep.subr.bf16.mxu0 0
  %72 = vmatpush2.bf16.msra.mxu0 0
  %73 = vmatprep.subr.bf16.mxu0 0
  %74 = vmatpush2.bf16.msra.mxu0 0
  %75 = vmatprep.subr.bf16.mxu0 0
  %76 = vmatpush2.bf16.msra.mxu0 0
  %77 = vmatprep.subr.bf16.mxu0 0
  %78 = vmatpush2.bf16.msra.mxu0 0
  %79 = vmatprep.subr.bf16.mxu0 0
  %80 = vmatpush2.bf16.msra.mxu0 0
  %81 = vmatprep.mubr.bf16.mxu0 0
  %82 = vmatmul.mubr.bf16.gmra.mxu0 %v47
  %v83 = vpop.f32.mrf.mxu0
  %v84 = vadd.f32 %v37, %v83
  %v85 = vpop.f32.mrf.mxu0
  %v86 = vpop.f32.mrf.mxu0
  %v87 = vadd.f32 %v37, %v86
  %v88 = vpop.f32.mrf.mxu0
  %89 = vdwg.mxu0
  %v90 = vmax.f32 %v84, 0.0
  %v91 = vmax.f32 %v87, 0.0
  %v92 = vpack.c.bf16 %v91, %v90
  %v93 = vld [vmem:[%s3] sm:$0xf]
  %v94 = vld [vmem:[%s3 + $0x4] sm:$0xf]
  %v95 = vld [vmem:[%s3 + $0x8] sm:$0xf]
  %v96 = vld [vmem:[%s3 + $0xc] sm:$0xf]
  %v97 = vld [vmem:[%s3 + $0x10] sm:$0xf]
  %v98 = vld [vmem:[%s3 + $0x14] sm:$0xf]
  %v99 = vld [vmem:[%s3 + $0x18] sm:$0xf]
  %v100 = vld [vmem:[%s3 + $0x1c] sm:$0xf]
  %v101 = vld [vmem:[%s3 + $0x20] sm:$0xf]
  %v102 = vld [vmem:[%s3 + $0x24] sm:$0xf]
  %v103 = vld [vmem:[%s3 + $0x28] sm:$0xf]
  %v104 = vld [vmem:[%s3 + $0x2c] sm:$0xf]
  %v105 = vld [vmem:[%s3 + $0x30] sm:$0xf]
  %v106 = vld [vmem:[%s3 + $0x34] sm:$0xf]
  %v107 = vld [vmem:[%s3 + $0x38] sm:$0xf]
  %v108 = vld [vmem:[%s3 + $0x3c] sm:$0xf]
  %v109 = vld [vmem:[%s4] sm:$0x1]
  %v111 = vlaneseq
  %v112 = vshrl.u32 %v111, 7
  %v113 = vsub.s32 0, %v112
  %v114 = vrot.slane %v109, %v113
  %v132 = vunpack.c.l.b16 %v93
  %v133 = vunpack.c.l.b16 %v94
  %v134 = vunpack.c.l.b16 %v95
  %v135 = vunpack.c.l.b16 %v96
  %v136 = vunpack.c.l.b16 %v97
  %v137 = vunpack.c.l.b16 %v98
  %v138 = vunpack.c.l.b16 %v99
  %v139 = vunpack.c.l.b16 %v100
  %v140 = vunpack.c.l.b16 %v101
  %v141 = vunpack.c.l.b16 %v102
  %v142 = vunpack.c.l.b16 %v103
  %v143 = vunpack.c.l.b16 %v104
  %v144 = vunpack.c.l.b16 %v105
  %v145 = vunpack.c.l.b16 %v106
  %v146 = vunpack.c.l.b16 %v107
  %v147 = vunpack.c.l.b16 %v108
  %v148 = vpack.c.b16 %v133, %v132
  %v149 = vpack.c.b16 %v135, %v134
  %v150 = vpack.c.b16 %v137, %v136
  %v151 = vpack.c.b16 %v139, %v138
  %v152 = vpack.c.b16 %v141, %v140
  %v153 = vpack.c.b16 %v143, %v142
  %v154 = vpack.c.b16 %v145, %v144
  %v155 = vpack.c.b16 %v147, %v146
  %164 = vmatprep.subr.bf16.mxu0 0
  %165 = vmatpush1.bf16.msra.mxu0 %v155
  %166 = vmatprep.subr.bf16.mxu0 0
  %167 = vmatpush1.bf16.msra.mxu0 %v154
  %168 = vmatprep.subr.bf16.mxu0 0
  %169 = vmatpush1.bf16.msra.mxu0 %v153
  %170 = vmatprep.subr.bf16.mxu0 0
  %171 = vmatpush1.bf16.msra.mxu0 %v152
  %172 = vmatprep.subr.bf16.mxu0 0
  %173 = vmatpush1.bf16.msra.mxu0 %v151
  %174 = vmatprep.subr.bf16.mxu0 0
  %175 = vmatpush1.bf16.msra.mxu0 %v150
  %176 = vmatprep.subr.bf16.mxu0 0
  %177 = vmatpush1.bf16.msra.mxu0 %v149
  %178 = vmatprep.subr.bf16.mxu0 0
  %179 = vmatpush1.bf16.msra.mxu0 %v148
  %180 = vmatprep.subr.bf16.mxu0 0
  %181 = vmatpush2.bf16.msra.mxu0 0
  %182 = vmatprep.subr.bf16.mxu0 0
  %183 = vmatpush2.bf16.msra.mxu0 0
  %184 = vmatprep.subr.bf16.mxu0 0
  %185 = vmatpush2.bf16.msra.mxu0 0
  %186 = vmatprep.subr.bf16.mxu0 0
  %187 = vmatpush2.bf16.msra.mxu0 0
  %188 = vmatprep.subr.bf16.mxu0 0
  %189 = vmatpush2.bf16.msra.mxu0 0
  %190 = vmatprep.subr.bf16.mxu0 0
  %191 = vmatpush2.bf16.msra.mxu0 0
  %192 = vmatprep.subr.bf16.mxu0 0
  %193 = vmatpush2.bf16.msra.mxu0 0
  %194 = vmatprep.subr.bf16.mxu0 0
  %195 = vmatpush2.bf16.msra.mxu0 0
  %196 = vmatprep.mubr.bf16.mxu0 0
  %197 = vmatmul.mubr.bf16.gmra.mxu0 %v92
  %v198 = vpop.f32.mrf.mxu0
  %v199 = vadd.f32 %v114, %v198
  %v200 = vpop.f32.mrf.mxu0
  %v201 = vpop.f32.mrf.mxu0
  %v202 = vadd.f32 %v114, %v201
  %v203 = vpop.f32.mrf.mxu0
  %204 = vdwg.mxu0
  %v205 = vmax.f32 %v199, 0.0
  %v206 = vmax.f32 %v202, 0.0
  %v207 = vpack.c.bf16 %v206, %v205
  %v208 = vld [vmem:[%s5] sm:$0xf]
  %v209 = vld [vmem:[%s5 + $0x4] sm:$0xf]
  %v210 = vld [vmem:[%s5 + $0x8] sm:$0xf]
  %v211 = vld [vmem:[%s5 + $0xc] sm:$0xf]
  %v212 = vld [vmem:[%s5 + $0x10] sm:$0xf]
  %v213 = vld [vmem:[%s5 + $0x14] sm:$0xf]
  %v214 = vld [vmem:[%s5 + $0x18] sm:$0xf]
  %v215 = vld [vmem:[%s5 + $0x1c] sm:$0xf]
  %v216 = vld [vmem:[%s5 + $0x20] sm:$0xf]
  %v217 = vld [vmem:[%s5 + $0x24] sm:$0xf]
  %v218 = vld [vmem:[%s5 + $0x28] sm:$0xf]
  %v219 = vld [vmem:[%s5 + $0x2c] sm:$0xf]
  %v220 = vld [vmem:[%s5 + $0x30] sm:$0xf]
  %v221 = vld [vmem:[%s5 + $0x34] sm:$0xf]
  %v222 = vld [vmem:[%s5 + $0x38] sm:$0xf]
  %v223 = vld [vmem:[%s5 + $0x3c] sm:$0xf]
  %v224 = vld [vmem:[%s6] sm:$0x1]
  %v226 = vlaneseq
  %v227 = vshrl.u32 %v226, 7
  %v228 = vsub.s32 0, %v227
  %v229 = vrot.slane %v224, %v228
  %v247 = vunpack.c.l.b16 %v208
  %v248 = vunpack.c.l.b16 %v209
  %v249 = vunpack.c.l.b16 %v210
  %v250 = vunpack.c.l.b16 %v211
  %v251 = vunpack.c.l.b16 %v212
  %v252 = vunpack.c.l.b16 %v213
  %v253 = vunpack.c.l.b16 %v214
  %v254 = vunpack.c.l.b16 %v215
  %v255 = vunpack.c.l.b16 %v216
  %v256 = vunpack.c.l.b16 %v217
  %v257 = vunpack.c.l.b16 %v218
  %v258 = vunpack.c.l.b16 %v219
  %v259 = vunpack.c.l.b16 %v220
  %v260 = vunpack.c.l.b16 %v221
  %v261 = vunpack.c.l.b16 %v222
  %v262 = vunpack.c.l.b16 %v223
  %v263 = vpack.c.b16 %v248, %v247
  %v264 = vpack.c.b16 %v250, %v249
  %v265 = vpack.c.b16 %v252, %v251
  %v266 = vpack.c.b16 %v254, %v253
  %v267 = vpack.c.b16 %v256, %v255
  %v268 = vpack.c.b16 %v258, %v257
  %v269 = vpack.c.b16 %v260, %v259
  %v270 = vpack.c.b16 %v262, %v261
  %279 = vmatprep.subr.bf16.mxu0 0
  %280 = vmatpush1.bf16.msra.mxu0 %v270
  %281 = vmatprep.subr.bf16.mxu0 0
  %282 = vmatpush1.bf16.msra.mxu0 %v269
  %283 = vmatprep.subr.bf16.mxu0 0
  %284 = vmatpush1.bf16.msra.mxu0 %v268
  %285 = vmatprep.subr.bf16.mxu0 0
  %286 = vmatpush1.bf16.msra.mxu0 %v267
  %287 = vmatprep.subr.bf16.mxu0 0
  %288 = vmatpush1.bf16.msra.mxu0 %v266
  %289 = vmatprep.subr.bf16.mxu0 0
  %290 = vmatpush1.bf16.msra.mxu0 %v265
  %291 = vmatprep.subr.bf16.mxu0 0
  %292 = vmatpush1.bf16.msra.mxu0 %v264
  %293 = vmatprep.subr.bf16.mxu0 0
  %294 = vmatpush1.bf16.msra.mxu0 %v263
  %295 = vmatprep.subr.bf16.mxu0 0
  %296 = vmatpush2.bf16.msra.mxu0 0
  %297 = vmatprep.subr.bf16.mxu0 0
  %298 = vmatpush2.bf16.msra.mxu0 0
  %299 = vmatprep.subr.bf16.mxu0 0
  %300 = vmatpush2.bf16.msra.mxu0 0
  %301 = vmatprep.subr.bf16.mxu0 0
  %302 = vmatpush2.bf16.msra.mxu0 0
  %303 = vmatprep.subr.bf16.mxu0 0
  %304 = vmatpush2.bf16.msra.mxu0 0
  %305 = vmatprep.subr.bf16.mxu0 0
  %306 = vmatpush2.bf16.msra.mxu0 0
  %307 = vmatprep.subr.bf16.mxu0 0
  %308 = vmatpush2.bf16.msra.mxu0 0
  %309 = vmatprep.subr.bf16.mxu0 0
  %310 = vmatpush2.bf16.msra.mxu0 0
  %311 = vmatprep.mubr.bf16.mxu0 0
  %312 = vmatmul.mubr.bf16.gmra.mxu0 %v207
  %v313 = vpop.f32.mrf.mxu0
  %v314 = vadd.f32 %v229, %v313
  %v315 = vpop.f32.mrf.mxu0
  %v316 = vpop.f32.mrf.mxu0
  %v317 = vadd.f32 %v229, %v316
  %v318 = vpop.f32.mrf.mxu0
  %319 = vdwg.mxu0
  %vm320 = vcmask 64512
  %321 = vst.msk [vmem:[%s7] sm:$0xff] %vm320, %v314
  %322 = vst.msk [vmem:[%s7 + $0x8] sm:$0xff] %vm320, %v317
  // Predicated region
  $region30: #{dqn_forward.1} parent=0 // pred_check
    _
  $region31: #{dqn_forward.1} parent=0 // pred_check_branch
    %324 = sbr.rel (0) target = $region33
  $region32: #{dqn_forward.1} parent=0 // pred_region
    _
  $region33: #{dqn_forward.1} parent=0 // pred_fallthru
    _
  // Predicated region
  $region34: #{dqn_forward.1} parent=0 // pred_check
    _
  $region35: #{dqn_forward.1} parent=0 // pred_check_branch
    %326 = sbr.rel (0) target = $region37
  $region36: #{dqn_forward.1} parent=0 // pred_region
    _
  $region37: #{dqn_forward.1} parent=0 // pred_fallthru
    _

</llo_original>
